<compile_context>
chip_gen: v5e
topology: v5e:2x2
jax: 0.10.0
libtpu: 0.0.40
codegen_flags: <defaults>
</compile_context>

<pallas_src>
import functools

import jax
import jax.numpy as jnp
from jax.experimental import pallas as pl
from jax.experimental.pallas import tpu as pltpu

_LANE = 128
_SUBLANE = 8
_NEG_BIG = -1e30              # pad-class bias: exp() underflows to exactly 0 in f32
_ROW_VMEM_BUDGET = 24 << 20   # streamed tiles + temporaries, safe on all gens


def _round_up(x, m):
    return pl.cdiv(x, m) * m


def _wgcn_mlp_kernel(x_ref, w1_ref, b1_ref, w2_ref, b2_ref, out_ref):
    # Layer 1: Linear + ReLU. Cast x to the weight dtype (bf16 by default)
    # in-register; MXU accumulates in f32.
    x = x_ref[...].astype(w1_ref.dtype)
    h = jnp.dot(x, w1_ref[...], preferred_element_type=jnp.float32)
    h = jnp.maximum(h + b1_ref[...], 0.0)                      # f32 VPU path

    # TODO(synk): F.dropout(p=0.5, training=self.training) skipped — kernel
    # implements eval-mode (identity) dropout.

    # Layer 2: Linear (activations cast to the weight dtype for the MXU).
    logits = jnp.dot(h.astype(w2_ref.dtype), w2_ref[...],
                     preferred_element_type=jnp.float32)
    logits = logits + b2_ref[...]                              # pad cols -> -1e30

    # log_softmax over the padded (lane-dense) class axis. Pad columns carry
    # -1e30 logits -> exp underflows to exactly 0, so the reduction matches the
    # C-wide reference; pad columns are dropped by the wrapper slice.
    m = jnp.max(logits, axis=-1, keepdims=True)
    shifted = logits - m
    lse = jnp.log(jnp.sum(jnp.exp(shifted), axis=-1, keepdims=True))
    logp = shifted - lse                                       # (tile, C_pad) f32

    # Lane-dense transposed store: (tile, C_pad) -> (C_pad, tile) rides the
    # otherwise-idle XLU; keep only the first C_sub sublanes so the HBM write
    # is ~C_sub*4 bytes/row instead of C_pad*4.
    logp_t = logp.T
    out_ref[...] = logp_t[: out_ref.shape[0], :].astype(out_ref.dtype)


def prepare_params(w1, b1, w2, b2, *, use_bf16=True):
    """One-time (model-init) padding/cast of the MLP parameters.

    w1: (F, H), b1: (1, H) or (H,), w2: (H, C), b2: (1, C) or (C,).
    Weights are stored pre-transposed (in_features, out_features) so the
    kernel computes x @ W. Hidden/class dims are zero-padded to lane width
    (128); pad class columns get a -1e30 bias so log_softmax ignores them.
    use_bf16 documents the inference numerics choice (bf16 MXU inputs,
    f32 accumulate); set False for a full-f32 forward (slower on v5e/v6e).
    """
    w1 = jnp.asarray(w1)
    b1 = jnp.asarray(b1).reshape(1, -1)
    w2 = jnp.asarray(w2)
    b2 = jnp.asarray(b2).reshape(1, -1)
    F, H = w1.shape
    C = w2.shape[1]
    H_pad = int(_round_up(H, _LANE))
    C_pad = int(_round_up(C, _LANE))
    wdt = jnp.bfloat16 if use_bf16 else jnp.float32

    w1p = jnp.zeros((F, H_pad), wdt).at[:, :H].set(w1.astype(wdt))
    b1p = jnp.zeros((1, H_pad), jnp.float32).at[:, :H].set(b1.astype(jnp.float32))
    w2p = jnp.zeros((H_pad, C_pad), wdt).at[:H, :C].set(w2.astype(wdt))
    b2p = jnp.full((1, C_pad), _NEG_BIG, jnp.float32).at[:, :C].set(
        b2.astype(jnp.float32))
    return w1p, b1p, w2p, b2p


@functools.partial(jax.jit, static_argnames=("class_num", "tile_n"))
def wgcn_forward(x, w1p, b1p, w2p, b2p, *, class_num, tile_n=None):
    """x: (N, F) float; padded params from prepare_params(). Returns (N, C) f32."""
    N, F = x.shape
    H_pad = w1p.shape[1]
    C_pad = w2p.shape[1]
    C_sub = int(_round_up(class_num, _SUBLANE))   # sublane-rounded class rows

    # ---- node-tile selection: always a multiple of 128 so the x block rows
    # ---- and the transposed-output lanes stay fully tile-aligned. ----------
    if tile_n is None:
        tile_n = 2048 if F <= 512 else 1024       # small-F datasets: bigger tile
    tile = min(int(_round_up(tile_n, _LANE)), int(_round_up(N, _LANE)))
    if N >= 2 * _LANE:
        # Guarantee >= 2 grid steps so dimension_semantics=("parallel",) can
        # spread the node axis across both v7x TensorCores (neutral on 1-TC
        # v5e/v6e).
        tile = min(tile, int(_round_up(pl.cdiv(N, 2), _LANE)))

    # VMEM-aware cap: x tile (double-buffered) + f32 temporaries + out tile.
    itemx = x.dtype.itemsize
    per_row = 2 * F * itemx + H_pad * 4 + 3 * C_pad * 4 + 2 * C_sub * 4
    w_bytes = 2 * (w1p.size * w1p.dtype.itemsize + w2p.size * w2p.dtype.itemsize
                   + b1p.size * b1p.dtype.itemsize + b2p.size * b2p.dtype.itemsize)
    tile_cap = max(_LANE, ((_ROW_VMEM_BUDGET // per_row) // _LANE) * _LANE)
    tile = max(_LANE, min(tile, tile_cap))

    grid = (pl.cdiv(N, tile),)

    # Raise the scoped-VMEM limit when needed (v5e default is only 16 MiB;
    # keep actual usage comfortably inside v7x's 64 MiB physical).
    vmem_limit = int(min(96 << 20,
                         max(32 << 20,
                             int(1.5 * (w_bytes + per_row * tile)) + (4 << 20))))

    cost = pl.CostEstimate(
        flops=2 * N * (F * H_pad + H_pad * C_pad),
        transcendentals=N * (C_pad + 1),
        bytes_accessed=(N * F * itemx
                        + w1p.size * w1p.dtype.itemsize
                        + w2p.size * w2p.dtype.itemsize
                        + (b1p.size + b2p.size) * 4
                        + C_sub * N * 4),
    )

    out_t = pl.pallas_call(
        _wgcn_mlp_kernel,
        out_shape=jax.ShapeDtypeStruct((C_sub, N), jnp.float32),
        grid_spec=pltpu.PrefetchScalarGridSpec(
            num_scalar_prefetch=0,
            grid=grid,
            in_specs=[
                pl.BlockSpec((tile, F), lambda i: (i, 0)),       # x tile (streamed, uncast)
                pl.BlockSpec((F, H_pad), lambda i: (0, 0)),      # W1 (resident)
                pl.BlockSpec((1, H_pad), lambda i: (0, 0)),      # b1 (resident)
                pl.BlockSpec((H_pad, C_pad), lambda i: (0, 0)),  # W2 (resident)
                pl.BlockSpec((1, C_pad), lambda i: (0, 0)),      # b2 (resident)
            ],
            out_specs=pl.BlockSpec((C_sub, tile), lambda i: (0, i)),
        ),
        compiler_params=pltpu.CompilerParams(
            dimension_semantics=("parallel",),
            vmem_limit_bytes=vmem_limit),
        cost_estimate=cost,
    )(x, w1p, b1p, w2p, b2p)                                     # (C_sub, N) f32

    # Consumer-side view back to the module's (N, C) layout: only C*4 bytes/row
    # move here instead of the old C_pad*4 padded writeback + re-slice.
    return out_t[:class_num, :].T


def _torch_linear_init(key, fan_in, fan_out):
    """Deterministic init mimicking nn.Linear: U(-1/sqrt(fan_in), 1/sqrt(fan_in))."""
    kw, kb = jax.random.split(key)
    bound = 1.0 / jnp.sqrt(fan_in)
    # Stored pre-transposed as (fan_in, fan_out) so the kernel does x @ W.
    w = jax.random.uniform(kw, (fan_in, fan_out), jnp.float32, -bound, bound)
    b = jax.random.uniform(kb, (1, fan_out), jnp.float32, -bound, bound)
    return w, b


def _reference(x, w1, b1, w2, b2, use_bf16=True):
    """Plain-JAX reference with the same dtype handling as the kernel."""
    cdt = jnp.bfloat16 if use_bf16 else jnp.float32
    h = jnp.dot(x.astype(cdt), w1.astype(cdt),
                preferred_element_type=jnp.float32) + b1
    h = jnp.maximum(h, 0.0)
    logits = jnp.dot(h.astype(cdt), w2.astype(cdt),
                     preferred_element_type=jnp.float32) + b2
    return jax.nn.log_softmax(logits, axis=1)


if __name__ == "__main__":
    # Small shapes consistent with the module:
    #   n_node=128, feature_dim=64, hidden_dim=32 -> 4*hidden=128, class_num=3 (pubmed)
    n_node, feature_dim = 128, 64
    hidden_dim = 32
    class_num = 3

    key = jax.random.PRNGKey(0)
    kx, k1, k2 = jax.random.split(key, 3)

    # self.x: the Wasserstein-barycenter-smoothed feature matrix. Stand in a
    # deterministic synthetic (n_node, feature_dim) matrix for it.
    # TODO(synk): get_input()/WGCN_layer barycenter preprocessing (POT-based
    # Wasserstein barycenters) is __init__-time data prep, not the forward pass.
    x = jax.random.normal(kx, (n_node, feature_dim), jnp.float32)

    w1, b1 = _torch_linear_init(k1, feature_dim, 4 * hidden_dim)   # mlp_in
    w2, b2 = _torch_linear_init(k2, 4 * hidden_dim, class_num)     # mlp_out

    # One-time model-init padding/cast (hoisted out of the per-call forward).
    params = prepare_params(w1, b1, w2, b2, use_bf16=True)

    out = wgcn_forward(x, *params, class_num=class_num)
    out = jax.block_until_ready(out)
    assert out.shape == (n_node, class_num)

    # Check against a reference using matching numerics (bf16 MXU inputs,
    # f32 accumulation).
    ref_matched = _reference(x, w1, b1, w2, b2, use_bf16=True)
    assert jnp.allclose(out, ref_matched, atol=5e-3, rtol=5e-3), (
        float(jnp.max(jnp.abs(out - ref_matched))))

    # Loose sanity check against the full-f32 PyTorch-equivalent forward.
    ref_f32 = _reference(x, w1, b1, w2, b2, use_bf16=False)
    assert jnp.allclose(out, ref_f32, atol=1e-1, rtol=1e-1), (
        float(jnp.max(jnp.abs(out - ref_f32))))

    print("KERNEL_OK")
</pallas_src>

<mosaic_0001>
module attributes {stable_mosaic.version = 11 : i64} {
  func.func @_wgcn_mlp_kernel(%arg0: i32, %arg1: memref<128x64xf32, #tpu.memory_space<vmem>>, %arg2: memref<64x128xbf16, #tpu.memory_space<vmem>>, %arg3: memref<1x128xf32, #tpu.memory_space<vmem>>, %arg4: memref<128x128xbf16, #tpu.memory_space<vmem>>, %arg5: memref<1x128xf32, #tpu.memory_space<vmem>>, %arg6: memref<8x128xf32, #tpu.memory_space<vmem>>) attributes {dimension_semantics = [#tpu.dimension_semantics<parallel>], iteration_bounds = array<i64: 1>, scalar_prefetch = 0 : i64, scratch_operands = 0 : i64, tpu.core_type = #tpu.core_type<tc>, window_params = [{transform_indices = @transform_0, window_bounds = array<i64: 128, 64>}, {pipeline_mode = #tpu.pipeline_mode<synchronous>, transform_indices = @transform_1, window_bounds = array<i64: 64, 128>}, {pipeline_mode = #tpu.pipeline_mode<synchronous>, transform_indices = @transform_2, window_bounds = array<i64: 1, 128>}, {pipeline_mode = #tpu.pipeline_mode<synchronous>, transform_indices = @transform_3, window_bounds = array<i64: 128, 128>}, {pipeline_mode = #tpu.pipeline_mode<synchronous>, transform_indices = @transform_4, window_bounds = array<i64: 1, 128>}, {transform_indices = @transform_5, window_bounds = array<i64: 8, 128>}]} {
    %c0 = arith.constant 0 : index
    %c0_0 = arith.constant 0 : index
    %0 = vector.load %arg1[%c0, %c0_0] : memref<128x64xf32, #tpu.memory_space<vmem>>, vector<128x64xf32>
    %1 = arith.truncf %0 : vector<128x64xf32> to vector<128x64xbf16>
    %c0_1 = arith.constant 0 : index
    %c0_2 = arith.constant 0 : index
    %2 = vector.load %arg2[%c0_1, %c0_2] : memref<64x128xbf16, #tpu.memory_space<vmem>>, vector<64x128xbf16>
    %cst = arith.constant dense<0.000000e+00> : vector<128x128xf32>
    %3 = tpu.matmul %1, %2, %cst {dimension_numbers = #tpu.dot_dimension_numbers<[1], [0], [0], [1], [0, 0, 1, 1], [], []>} : vector<128x64xbf16>, vector<64x128xbf16>, vector<128x128xf32> -> vector<128x128xf32>
    %c0_3 = arith.constant 0 : index
    %c0_4 = arith.constant 0 : index
    %4 = vector.load %arg3[%c0_3, %c0_4] : memref<1x128xf32, #tpu.memory_space<vmem>>, vector<1x128xf32>
    %5 = vector.broadcast %4 : vector<1x128xf32> to vector<128x128xf32>
    %6 = arith.addf %3, %5 : vector<128x128xf32>
    %cst_5 = arith.constant 0.000000e+00 : f32
    %7 = vector.broadcast %cst_5 : f32 to vector<128x128xf32>
    %8 = arith.maximumf %6, %7 : vector<128x128xf32>
    %9 = arith.truncf %8 : vector<128x128xf32> to vector<128x128xbf16>
    %c0_6 = arith.constant 0 : index
    %c0_7 = arith.constant 0 : index
    %10 = vector.load %arg4[%c0_6, %c0_7] : memref<128x128xbf16, #tpu.memory_space<vmem>>, vector<128x128xbf16>
    %cst_8 = arith.constant dense<0.000000e+00> : vector<128x128xf32>
    %11 = tpu.matmul %9, %10, %cst_8 {dimension_numbers = #tpu.dot_dimension_numbers<[1], [0], [0], [1], [0, 0, 1, 1], [], []>} : vector<128x128xbf16>, vector<128x128xbf16>, vector<128x128xf32> -> vector<128x128xf32>
    %c0_9 = arith.constant 0 : index
    %c0_10 = arith.constant 0 : index
    %12 = vector.load %arg5[%c0_9, %c0_10] : memref<1x128xf32, #tpu.memory_space<vmem>>, vector<1x128xf32>
    %13 = vector.broadcast %12 : vector<1x128xf32> to vector<128x128xf32>
    %14 = arith.addf %11, %13 : vector<128x128xf32>
    %cst_11 = arith.constant dense<0xFF800000> : vector<128xf32>
    %15 = vector.multi_reduction <maximumf>, %14, %cst_11 [1] : vector<128x128xf32> to vector<128xf32>
    %16 = vector.shape_cast %15 : vector<128xf32> to vector<128x1xf32>
    %17 = vector.broadcast %16 : vector<128x1xf32> to vector<128x128xf32>
    %18 = arith.subf %14, %17 : vector<128x128xf32>
    %19 = math.exp %18 : vector<128x128xf32>
    %cst_12 = arith.constant dense<0.000000e+00> : vector<128xf32>
    %20 = vector.multi_reduction <add>, %19, %cst_12 [1] : vector<128x128xf32> to vector<128xf32>
    %21 = vector.shape_cast %20 : vector<128xf32> to vector<128x1xf32>
    %22 = math.log %21 : vector<128x1xf32>
    %23 = vector.broadcast %22 : vector<128x1xf32> to vector<128x128xf32>
    %24 = arith.subf %18, %23 : vector<128x128xf32>
    %25 = tpu.transpose %24, [1, 0] : vector<128x128xf32> -> vector<128x128xf32>
    %26 = vector.extract_strided_slice %25 {offsets = [0, 0], sizes = [8, 128], strides = [1, 1]} : vector<128x128xf32> to vector<8x128xf32>
    %c0_13 = arith.constant 0 : index
    %c0_14 = arith.constant 0 : index
    %27 = vector.load %arg6[%c0_13, %c0_14] : memref<8x128xf32, #tpu.memory_space<vmem>>, vector<8x128xf32>
    tpu.vector_store %arg6[%c0_13, %c0_14], %26 {strides = array<i32>} : memref<8x128xf32, #tpu.memory_space<vmem>>, vector<8x128xf32>,
    return
  }
  func.func @transform_0(%arg0: i32) -> (i32, i32) {
    %c0_i32 = arith.constant 0 : i32
    %c0_i32_0 = arith.constant 0 : i32
    return %arg0, %c0_i32 : i32, i32
  }
  func.func @transform_1(%arg0: i32) -> (i32, i32) {
    %c0_i32 = arith.constant 0 : i32
    %c0_i32_0 = arith.constant 0 : i32
    %c0_i32_1 = arith.constant 0 : i32
    return %c0_i32, %c0_i32_0 : i32, i32
  }
  func.func @transform_2(%arg0: i32) -> (i32, i32) {
    %c0_i32 = arith.constant 0 : i32
    %c0_i32_0 = arith.constant 0 : i32
    %c0_i32_1 = arith.constant 0 : i32
    return %c0_i32, %c0_i32_0 : i32, i32
  }
  func.func @transform_3(%arg0: i32) -> (i32, i32) {
    %c0_i32 = arith.constant 0 : i32
    %c0_i32_0 = arith.constant 0 : i32
    %c0_i32_1 = arith.constant 0 : i32
    return %c0_i32, %c0_i32_0 : i32, i32
  }
  func.func @transform_4(%arg0: i32) -> (i32, i32) {
    %c0_i32 = arith.constant 0 : i32
    %c0_i32_0 = arith.constant 0 : i32
    %c0_i32_1 = arith.constant 0 : i32
    return %c0_i32, %c0_i32_0 : i32, i32
  }
  func.func @transform_5(%arg0: i32) -> (i32, i32) {
    %c0_i32 = arith.constant 0 : i32
    %c0_i32_0 = arith.constant 0 : i32
    return %c0_i32, %arg0 : i32, i32
  }
}

</mosaic_0001>

<llo_original>
// kernel: wgcn_forward.1
$region0: #{wgcn_forward.1}
  #allocation0 [shape = 'u32[]', space=smem, size = 0x4, offset = 0x4, fixed_abs, tag = 'smem constant byte address 0x4 - core index']
  #allocation1 [shape = 'u32[72,128]{1,0:T(1,128)}', space=vmem, size = 0x9000, scoped, tag = 'internal scratch']
  %s0 = inlined_call_operand.vmem [shape: f32[128,64], index: 0, kind: input, shape index: {}]
  %s1 = inlined_call_operand.vmem [shape: bf16[64,128], index: 1, kind: input, shape index: {}]
  %s2 = inlined_call_operand.vmem [shape: f32[1,128], index: 2, kind: input, shape index: {}]
  %s3 = inlined_call_operand.vmem [shape: bf16[128,128], index: 3, kind: input, shape index: {}]
  %s4 = inlined_call_operand.vmem [shape: f32[1,128], index: 4, kind: input, shape index: {}]
  %s5 = inlined_call_operand.vmem [shape: f32[8,128], index: 5, kind: output, shape index: {}]
  %s6 = sld [smem:[#allocation0]]
  $region30: #{wgcn_forward.1} parent=0
    _
  %s8 = ssub.s32 1, %s6
  %s9 = scalar_select 0, %s8, %s6
  // Predicated region
  $region2: #{wgcn_forward.1} parent=0 // pred_check
    _
  $region3: #{wgcn_forward.1} parent=0 // pred_check_branch
    %11 = sbr.rel (0) target = $region5
  $region4: #{wgcn_forward.1} parent=0 // pred_region
    _
  $region5: #{wgcn_forward.1} parent=0 // pred_fallthru
    _
  // Predicated region
  $region6: #{wgcn_forward.1} parent=0 // pred_check
    _
  $region7: #{wgcn_forward.1} parent=0 // pred_check_branch
    %13 = sbr.rel (0) target = $region9
  $region8: #{wgcn_forward.1} parent=0 // pred_region
    _
  $region9: #{wgcn_forward.1} parent=0 // pred_fallthru
    _
  // Predicated region
  $region10: #{wgcn_forward.1} parent=0 // pred_check
    _
  $region11: #{wgcn_forward.1} parent=0 // pred_check_branch
    %15 = sbr.rel (0) target = $region13
  $region12: #{wgcn_forward.1} parent=0 // pred_region
    _
  $region13: #{wgcn_forward.1} parent=0 // pred_fallthru
    _
  // Predicated region
  $region14: #{wgcn_forward.1} parent=0 // pred_check
    _
  $region15: #{wgcn_forward.1} parent=0 // pred_check_branch
    %17 = sbr.rel (0) target = $region17
  $region16: #{wgcn_forward.1} parent=0 // pred_region
    _
  $region17: #{wgcn_forward.1} parent=0 // pred_fallthru
    _
  // Predicated region
  $region18: #{wgcn_forward.1} parent=0 // pred_check
    _
  $region19: #{wgcn_forward.1} parent=0 // pred_check_branch
    %19 = sbr.rel (0) target = $region21
  $region20: #{wgcn_forward.1} parent=0 // pred_region
    _
  $region21: #{wgcn_forward.1} parent=0 // pred_fallthru
    _
  %v21 = vld [vmem:[%s0] sm:$0xff]
  %v22 = vld [vmem:[%s0 + $0x8] sm:$0xff]
  %v23 = vld [vmem:[%s0 + $0x10] sm:$0xff]
  %v24 = vld [vmem:[%s0 + $0x18] sm:$0xff]
  %v25 = vld [vmem:[%s0 + $0x20] sm:$0xff]
  %v26 = vld [vmem:[%s0 + $0x28] sm:$0xff]
  %v27 = vld [vmem:[%s0 + $0x30] sm:$0xff]
  %v28 = vld [vmem:[%s0 + $0x38] sm:$0xff]
  %v29 = vld [vmem:[%s0 + $0x40] sm:$0xff]
  %v30 = vld [vmem:[%s0 + $0x48] sm:$0xff]
  %v31 = vld [vmem:[%s0 + $0x50] sm:$0xff]
  %v32 = vld [vmem:[%s0 + $0x58] sm:$0xff]
  %v33 = vld [vmem:[%s0 + $0x60] sm:$0xff]
  %v34 = vld [vmem:[%s0 + $0x68] sm:$0xff]
  %v35 = vld [vmem:[%s0 + $0x70] sm:$0xff]
  %v36 = vld [vmem:[%s0 + $0x78] sm:$0xff]
  %v37 = vpack.c.bf16 %v22, %v21
  %v38 = vpack.c.bf16 %v24, %v23
  %v39 = vpack.c.bf16 %v26, %v25
  %v40 = vpack.c.bf16 %v28, %v27
  %v41 = vpack.c.bf16 %v30, %v29
  %v42 = vpack.c.bf16 %v32, %v31
  %v43 = vpack.c.bf16 %v34, %v33
  %v44 = vpack.c.bf16 %v36, %v35
  %v45 = vld [vmem:[%s1] sm:$0xf]
  %v46 = vld [vmem:[%s1 + $0x4] sm:$0xf]
  %v47 = vld [vmem:[%s1 + $0x8] sm:$0xf]
  %v48 = vld [vmem:[%s1 + $0xc] sm:$0xf]
  %v49 = vld [vmem:[%s1 + $0x10] sm:$0xf]
  %v50 = vld [vmem:[%s1 + $0x14] sm:$0xf]
  %v51 = vld [vmem:[%s1 + $0x18] sm:$0xf]
  %v52 = vld [vmem:[%s1 + $0x1c] sm:$0xf]
  %v53 = vld [vmem:[%s2] sm:$0x1]
  %v55 = vperm.slane %v53, 0
  %v65 = vunpack.c.l.b16 %v45
  %v66 = vunpack.c.l.b16 %v46
  %v67 = vunpack.c.l.b16 %v47
  %v68 = vunpack.c.l.b16 %v48
  %v69 = vunpack.c.l.b16 %v49
  %v70 = vunpack.c.l.b16 %v50
  %v71 = vunpack.c.l.b16 %v51
  %v72 = vunpack.c.l.b16 %v52
  %v73 = vpack.c.b16 %v66, %v65
  %v74 = vpack.c.b16 %v68, %v67
  %v75 = vpack.c.b16 %v70, %v69
  %v76 = vpack.c.b16 %v72, %v71
  %vm81 = vcmask 523264
  %v83 = vsel %vm81, %v37, 0
  %v86 = vsel %vm81, %v38, 0
  %v89 = vsel %vm81, %v39, 0
  %v92 = vsel %vm81, %v40, 0
  %v95 = vsel %vm81, %v41, 0
  %v98 = vsel %vm81, %v42, 0
  %v101 = vsel %vm81, %v43, 0
  %v104 = vsel %vm81, %v44, 0
  %106 = vmatpush.bf16.msra.mxu0 0
  %107 = vmatpush.bf16.msra.mxu0 0
  %108 = vmatpush.bf16.msra.mxu0 0
  %109 = vmatpush.bf16.msra.mxu0 0
  %110 = vmatpush.bf16.msra.mxu0 %v76
  %111 = vmatpush.bf16.msra.mxu0 %v75
  %112 = vmatpush.bf16.msra.mxu0 %v74
  %113 = vmatpush.bf16.msra.mxu0 %v73
  %114 = vmatmul.bf16.gmra.mxu0 %v83
  %v115 = vpop.f32.mrf.mxu0
  %v116 = vadd.f32 %v55, %v115
  %v117 = vpop.f32.mrf.mxu0
  %v118 = vadd.f32 %v55, %v117
  %119 = vmatmul.bf16.gmra.mxu0 %v86
  %v120 = vpop.f32.mrf.mxu0
  %v121 = vadd.f32 %v55, %v120
  %v122 = vpop.f32.mrf.mxu0
  %v123 = vadd.f32 %v55, %v122
  %124 = vmatmul.bf16.gmra.mxu0 %v89
  %v125 = vpop.f32.mrf.mxu0
  %v126 = vadd.f32 %v55, %v125
  %v127 = vpop.f32.mrf.mxu0
  %v128 = vadd.f32 %v55, %v127
  %129 = vmatmul.bf16.gmra.mxu0 %v92
  %v130 = vpop.f32.mrf.mxu0
  %v131 = vadd.f32 %v55, %v130
  %v132 = vpop.f32.mrf.mxu0
  %v133 = vadd.f32 %v55, %v132
  %134 = vmatmul.bf16.gmra.mxu0 %v95
  %v135 = vpop.f32.mrf.mxu0
  %v136 = vadd.f32 %v55, %v135
  %v137 = vpop.f32.mrf.mxu0
  %v138 = vadd.f32 %v55, %v137
  %139 = vmatmul.bf16.gmra.mxu0 %v98
  %v140 = vpop.f32.mrf.mxu0
  %v141 = vadd.f32 %v55, %v140
  %v142 = vpop.f32.mrf.mxu0
  %v143 = vadd.f32 %v55, %v142
  %144 = vmatmul.bf16.gmra.mxu0 %v101
  %v145 = vpop.f32.mrf.mxu0
  %v146 = vadd.f32 %v55, %v145
  %v147 = vpop.f32.mrf.mxu0
  %v148 = vadd.f32 %v55, %v147
  %149 = vmatmul.bf16.gmra.mxu0 %v104
  %v150 = vpop.f32.mrf.mxu0
  %v151 = vadd.f32 %v55, %v150
  %v152 = vpop.f32.mrf.mxu0
  %v153 = vadd.f32 %v55, %v152
  %154 = vdwg.mxu0
  %v155 = vmax.f32 %v116, 0.0
  %v156 = vmax.f32 %v118, 0.0
  %v157 = vmax.f32 %v121, 0.0
  %v158 = vmax.f32 %v123, 0.0
  %v159 = vmax.f32 %v126, 0.0
  %v160 = vmax.f32 %v128, 0.0
  %v161 = vmax.f32 %v131, 0.0
  %v162 = vmax.f32 %v133, 0.0
  %v163 = vmax.f32 %v136, 0.0
  %v164 = vmax.f32 %v138, 0.0
  %v165 = vmax.f32 %v141, 0.0
  %v166 = vmax.f32 %v143, 0.0
  %v167 = vmax.f32 %v146, 0.0
  %v168 = vmax.f32 %v148, 0.0
  %v169 = vmax.f32 %v151, 0.0
  %v170 = vmax.f32 %v153, 0.0
  %v171 = vpack.c.bf16 %v156, %v155
  %v172 = vpack.c.bf16 %v158, %v157
  %v173 = vpack.c.bf16 %v160, %v159
  %v174 = vpack.c.bf16 %v162, %v161
  %v175 = vpack.c.bf16 %v164, %v163
  %v176 = vpack.c.bf16 %v166, %v165
  %v177 = vpack.c.bf16 %v168, %v167
  %v178 = vpack.c.bf16 %v170, %v169
  %v179 = vld [vmem:[%s3] sm:$0xf]
  %v180 = vld [vmem:[%s3 + $0x4] sm:$0xf]
  %v181 = vld [vmem:[%s3 + $0x8] sm:$0xf]
  %v182 = vld [vmem:[%s3 + $0xc] sm:$0xf]
  %v183 = vld [vmem:[%s3 + $0x10] sm:$0xf]
  %v184 = vld [vmem:[%s3 + $0x14] sm:$0xf]
  %v185 = vld [vmem:[%s3 + $0x18] sm:$0xf]
  %v186 = vld [vmem:[%s3 + $0x1c] sm:$0xf]
  %v187 = vld [vmem:[%s3 + $0x20] sm:$0xf]
  %v188 = vld [vmem:[%s3 + $0x24] sm:$0xf]
  %v189 = vld [vmem:[%s3 + $0x28] sm:$0xf]
  %v190 = vld [vmem:[%s3 + $0x2c] sm:$0xf]
  %v191 = vld [vmem:[%s3 + $0x30] sm:$0xf]
  %v192 = vld [vmem:[%s3 + $0x34] sm:$0xf]
  %v193 = vld [vmem:[%s3 + $0x38] sm:$0xf]
  %v194 = vld [vmem:[%s3 + $0x3c] sm:$0xf]
  %v195 = vld [vmem:[%s4] sm:$0x1]
  %v197 = vperm.slane %v195, 0
  %v215 = vunpack.c.l.b16 %v179
  %v216 = vunpack.c.l.b16 %v180
  %v217 = vunpack.c.l.b16 %v181
  %v218 = vunpack.c.l.b16 %v182
  %v219 = vunpack.c.l.b16 %v183
  %v220 = vunpack.c.l.b16 %v184
  %v221 = vunpack.c.l.b16 %v185
  %v222 = vunpack.c.l.b16 %v186
  %v223 = vunpack.c.l.b16 %v187
  %v224 = vunpack.c.l.b16 %v188
  %v225 = vunpack.c.l.b16 %v189
  %v226 = vunpack.c.l.b16 %v190
  %v227 = vunpack.c.l.b16 %v191
  %v228 = vunpack.c.l.b16 %v192
  %v229 = vunpack.c.l.b16 %v193
  %v230 = vunpack.c.l.b16 %v194
  %v231 = vpack.c.b16 %v216, %v215
  %v232 = vpack.c.b16 %v218, %v217
  %v233 = vpack.c.b16 %v220, %v219
  %v234 = vpack.c.b16 %v222, %v221
  %v235 = vpack.c.b16 %v224, %v223
  %v236 = vpack.c.b16 %v226, %v225
  %v237 = vpack.c.b16 %v228, %v227
  %v238 = vpack.c.b16 %v230, %v229
  %247 = vmatpush.bf16.msra.mxu0 %v238
  %248 = vmatpush.bf16.msra.mxu0 %v237
  %249 = vmatpush.bf16.msra.mxu0 %v236
  %250 = vmatpush.bf16.msra.mxu0 %v235
  %251 = vmatpush.bf16.msra.mxu0 %v234
  %252 = vmatpush.bf16.msra.mxu0 %v233
  %253 = vmatpush.bf16.msra.mxu0 %v232
  %254 = vmatpush.bf16.msra.mxu0 %v231
  %255 = vmatmul.bf16.gmra.mxu0 %v171
  %v256 = vpop.f32.mrf.mxu0
  %v257 = vadd.f32 %v197, %v256
  %v258 = vpop.f32.mrf.mxu0
  %v259 = vadd.f32 %v197, %v258
  %260 = vmatmul.bf16.gmra.mxu0 %v172
  %v261 = vpop.f32.mrf.mxu0
  %v262 = vadd.f32 %v197, %v261
  %v263 = vpop.f32.mrf.mxu0
  %v264 = vadd.f32 %v197, %v263
  %265 = vmatmul.bf16.gmra.mxu0 %v173
  %v266 = vpop.f32.mrf.mxu0
  %v267 = vadd.f32 %v197, %v266
  %v268 = vpop.f32.mrf.mxu0
  %v269 = vadd.f32 %v197, %v268
  %270 = vmatmul.bf16.gmra.mxu0 %v174
  %v271 = vpop.f32.mrf.mxu0
  %v272 = vadd.f32 %v197, %v271
  %v273 = vpop.f32.mrf.mxu0
  %v274 = vadd.f32 %v197, %v273
  %275 = vmatmul.bf16.gmra.mxu0 %v175
  %v276 = vpop.f32.mrf.mxu0
  %v277 = vadd.f32 %v197, %v276
  %v278 = vpop.f32.mrf.mxu0
  %v279 = vadd.f32 %v197, %v278
  %280 = vmatmul.bf16.gmra.mxu0 %v176
  %v281 = vpop.f32.mrf.mxu0
  %v282 = vadd.f32 %v197, %v281
  %v283 = vpop.f32.mrf.mxu0
  %v284 = vadd.f32 %v197, %v283
  %285 = vmatmul.bf16.gmra.mxu0 %v177
  %v286 = vpop.f32.mrf.mxu0
  %v287 = vadd.f32 %v197, %v286
  %v288 = vpop.f32.mrf.mxu0
  %v289 = vadd.f32 %v197, %v288
  %290 = vmatmul.bf16.gmra.mxu0 %v178
  %v291 = vpop.f32.mrf.mxu0
  %v292 = vadd.f32 %v197, %v291
  %v293 = vpop.f32.mrf.mxu0
  %v294 = vadd.f32 %v197, %v293
  %295 = vdwg.mxu0
  %296 = vmax.xlane.f32.xlu0 %v257
  %v297 = vpop.xlane.xlu0 %296
  %298 = vmax.xlane.f32.xlu0 %v259
  %v299 = vpop.xlane.xlu0 %298
  %300 = vmax.xlane.f32.xlu0 %v262
  %v301 = vpop.xlane.xlu0 %300
  %302 = vmax.xlane.f32.xlu0 %v264
  %v303 = vpop.xlane.xlu0 %302
  %304 = vmax.xlane.f32.xlu0 %v267
  %v305 = vpop.xlane.xlu0 %304
  %306 = vmax.xlane.f32.xlu0 %v269
  %v307 = vpop.xlane.xlu0 %306
  %308 = vmax.xlane.f32.xlu0 %v272
  %v309 = vpop.xlane.xlu0 %308
  %310 = vmax.xlane.f32.xlu0 %v274
  %v311 = vpop.xlane.xlu0 %310
  %312 = vmax.xlane.f32.xlu0 %v277
  %v313 = vpop.xlane.xlu0 %312
  %314 = vmax.xlane.f32.xlu0 %v279
  %v315 = vpop.xlane.xlu0 %314
  %316 = vmax.xlane.f32.xlu0 %v282
  %v317 = vpop.xlane.xlu0 %316
  %318 = vmax.xlane.f32.xlu0 %v284
  %v319 = vpop.xlane.xlu0 %318
  %320 = vmax.xlane.f32.xlu0 %v287
  %v321 = vpop.xlane.xlu0 %320
  %322 = vmax.xlane.f32.xlu0 %v289
  %v323 = vpop.xlane.xlu0 %322
  %324 = vmax.xlane.f32.xlu0 %v292
  %v325 = vpop.xlane.xlu0 %324
  %326 = vmax.xlane.f32.xlu0 %v294
  %v327 = vpop.xlane.xlu0 %326
  %v328 = vsub.f32 %v257, %v297
  %v329 = vsub.f32 %v259, %v299
  %v330 = vsub.f32 %v262, %v301
  %v331 = vsub.f32 %v264, %v303
  %v332 = vsub.f32 %v267, %v305
  %v333 = vsub.f32 %v269, %v307
  %v334 = vsub.f32 %v272, %v309
  %v335 = vsub.f32 %v274, %v311
  %v336 = vsub.f32 %v277, %v313
  %v337 = vsub.f32 %v279, %v315
  %v338 = vsub.f32 %v282, %v317
  %v339 = vsub.f32 %v284, %v319
  %v340 = vsub.f32 %v287, %v321
  %v341 = vsub.f32 %v289, %v323
  %v342 = vsub.f32 %v292, %v325
  %v343 = vsub.f32 %v294, %v327
  %v344 = vmul.f32 %v328, 1.442695
  %v345 = vpow.pop %v344
  %v346 = vmul.f32 %v329, 1.442695
  %v347 = vpow.pop %v346
  %v348 = vmul.f32 %v330, 1.442695
  %v349 = vpow.pop %v348
  %v350 = vmul.f32 %v331, 1.442695
  %v351 = vpow.pop %v350
  %v352 = vmul.f32 %v332, 1.442695
  %v353 = vpow.pop %v352
  %v354 = vmul.f32 %v333, 1.442695
  %v355 = vpow.pop %v354
  %v356 = vmul.f32 %v334, 1.442695
  %v357 = vpow.pop %v356
  %v358 = vmul.f32 %v335, 1.442695
  %v359 = vpow.pop %v358
  %v360 = vmul.f32 %v336, 1.442695
  %v361 = vpow.pop %v360
  %v362 = vmul.f32 %v337, 1.442695
  %v363 = vpow.pop %v362
  %v364 = vmul.f32 %v338, 1.442695
  %v365 = vpow.pop %v364
  %v366 = vmul.f32 %v339, 1.442695
  %v367 = vpow.pop %v366
  %v368 = vmul.f32 %v340, 1.442695
  %v369 = vpow.pop %v368
  %v370 = vmul.f32 %v341, 1.442695
  %v371 = vpow.pop %v370
  %v372 = vmul.f32 %v342, 1.442695
  %v373 = vpow.pop %v372
  %v374 = vmul.f32 %v343, 1.442695
  %v375 = vpow.pop %v374
  %376 = vadd.xlane.f32.xlu0 %v345
  %v377 = vpop.xlane.xlu0 %376
  %378 = vadd.xlane.f32.xlu0 %v347
  %v379 = vpop.xlane.xlu0 %378
  %380 = vadd.xlane.f32.xlu0 %v349
  %v381 = vpop.xlane.xlu0 %380
  %382 = vadd.xlane.f32.xlu0 %v351
  %v383 = vpop.xlane.xlu0 %382
  %384 = vadd.xlane.f32.xlu0 %v353
  %v385 = vpop.xlane.xlu0 %384
  %386 = vadd.xlane.f32.xlu0 %v355
  %v387 = vpop.xlane.xlu0 %386
  %388 = vadd.xlane.f32.xlu0 %v357
  %v389 = vpop.xlane.xlu0 %388
  %390 = vadd.xlane.f32.xlu0 %v359
  %v391 = vpop.xlane.xlu0 %390
  %392 = vadd.xlane.f32.xlu0 %v361
  %v393 = vpop.xlane.xlu0 %392
  %394 = vadd.xlane.f32.xlu0 %v363
  %v395 = vpop.xlane.xlu0 %394
  %396 = vadd.xlane.f32.xlu0 %v365
  %v397 = vpop.xlane.xlu0 %396
  %398 = vadd.xlane.f32.xlu0 %v367
  %v399 = vpop.xlane.xlu0 %398
  %400 = vadd.xlane.f32.xlu0 %v369
  %v401 = vpop.xlane.xlu0 %400
  %402 = vadd.xlane.f32.xlu0 %v371
  %v403 = vpop.xlane.xlu0 %402
  %404 = vadd.xlane.f32.xlu0 %v373
  %v405 = vpop.xlane.xlu0 %404
  %406 = vadd.xlane.f32.xlu0 %v375
  %v407 = vpop.xlane.xlu0 %406
  %v408 = vlog2.pop %v377
  %v409 = vmul.f32 %v408, 0.6931472
  %v410 = vlog2.pop %v379
  %v411 = vmul.f32 %v410, 0.6931472
  %v412 = vlog2.pop %v381
  %v413 = vmul.f32 %v412, 0.6931472
  %v414 = vlog2.pop %v383
  %v415 = vmul.f32 %v414, 0.6931472
  %v416 = vlog2.pop %v385
  %v417 = vmul.f32 %v416, 0.6931472
  %v418 = vlog2.pop %v387
  %v419 = vmul.f32 %v418, 0.6931472
  %v420 = vlog2.pop %v389
  %v421 = vmul.f32 %v420, 0.6931472
  %v422 = vlog2.pop %v391
  %v423 = vmul.f32 %v422, 0.6931472
  %v424 = vlog2.pop %v393
  %v425 = vmul.f32 %v424, 0.6931472
  %v426 = vlog2.pop %v395
  %v427 = vmul.f32 %v426, 0.6931472
  %v428 = vlog2.pop %v397
  %v429 = vmul.f32 %v428, 0.6931472
  %v430 = vlog2.pop %v399
  %v431 = vmul.f32 %v430, 0.6931472
  %v432 = vlog2.pop %v401
  %v433 = vmul.f32 %v432, 0.6931472
  %v434 = vlog2.pop %v403
  %v435 = vmul.f32 %v434, 0.6931472
  %v436 = vlog2.pop %v405
  %v437 = vmul.f32 %v436, 0.6931472
  %v438 = vlog2.pop %v407
  %v439 = vmul.f32 %v438, 0.6931472
  %v440 = vsub.f32 %v328, %v409
  %v441 = vsub.f32 %v329, %v411
  %v442 = vsub.f32 %v330, %v413
  %v443 = vsub.f32 %v331, %v415
  %v444 = vsub.f32 %v332, %v417
  %v445 = vsub.f32 %v333, %v419
  %v446 = vsub.f32 %v334, %v421
  %v447 = vsub.f32 %v335, %v423
  %v448 = vsub.f32 %v336, %v425
  %v449 = vsub.f32 %v337, %v427
  %v450 = vsub.f32 %v338, %v429
  %v451 = vsub.f32 %v339, %v431
  %v452 = vsub.f32 %v340, %v433
  %v453 = vsub.f32 %v341, %v435
  %v454 = vsub.f32 %v342, %v437
  %v455 = vsub.f32 %v343, %v439
  %456 = vxpose.xlu0.b32.start [1/16] %v440, 128
  %457 = vxpose.xlu0.b32.cont [2/16] %v441, 128
  %458 = vxpose.xlu0.b32.cont [3/16] %v442, 128
  %459 = vxpose.xlu0.b32.cont [4/16] %v443, 128
  %460 = vxpose.xlu0.b32.cont [5/16] %v444, 128
  %461 = vxpose.xlu0.b32.cont [6/16] %v445, 128
  %462 = vxpose.xlu0.b32.cont [7/16] %v446, 128
  %463 = vxpose.xlu0.b32.cont [8/16] %v447, 128
  %464 = vxpose.xlu0.b32.cont [9/16] %v448, 128
  %465 = vxpose.xlu0.b32.cont [10/16] %v449, 128
  %466 = vxpose.xlu0.b32.cont [11/16] %v450, 128
  %467 = vxpose.xlu0.b32.cont [12/16] %v451, 128
  %468 = vxpose.xlu0.b32.cont [13/16] %v452, 128
  %469 = vxpose.xlu0.b32.cont [14/16] %v453, 128
  %470 = vxpose.xlu0.b32.cont [15/16] %v454, 128
  %471 = vxpose.xlu0.b32.end [16/16] %v455, 128
  %v472 = vpop.trf.xlu0
  %v473 = vpop.trf.xlu0
  %v474 = vpop.trf.xlu0
  %v475 = vpop.trf.xlu0
  %v476 = vpop.trf.xlu0
  %v477 = vpop.trf.xlu0
  %v478 = vpop.trf.xlu0
  %v479 = vpop.trf.xlu0
  %v480 = vpop.trf.xlu0
  %v481 = vpop.trf.xlu0
  %v482 = vpop.trf.xlu0
  %v483 = vpop.trf.xlu0
  %v484 = vpop.trf.xlu0
  %v485 = vpop.trf.xlu0
  %v486 = vpop.trf.xlu0
  %v487 = vpop.trf.xlu0
  %488 = vst [vmem:[%s5] sm:$0xff] %v472
  // Predicated region
  $region22: #{wgcn_forward.1} parent=0 // pred_check
    _
  $region23: #{wgcn_forward.1} parent=0 // pred_check_branch
    %490 = sbr.rel (0) target = $region25
  $region24: #{wgcn_forward.1} parent=0 // pred_region
    _
  $region25: #{wgcn_forward.1} parent=0 // pred_fallthru
    _
  // Predicated region
  $region26: #{wgcn_forward.1} parent=0 // pred_check
    _
  $region27: #{wgcn_forward.1} parent=0 // pred_check_branch
    %492 = sbr.rel (0) target = $region29
  $region28: #{wgcn_forward.1} parent=0 // pred_region
    _
  $region29: #{wgcn_forward.1} parent=0 // pred_fallthru
    _

</llo_original>
